<compile_context>
chip_gen: v6e
topology: v6e:2x2x1
jax: 0.10.0
libtpu: 0.0.40
codegen_flags: <defaults>
</compile_context>

<pallas_src>
import math

import jax
import jax.numpy as jnp
from jax.experimental import pallas as pl
from jax.experimental.pallas import tpu as pltpu


LANE = 128                  # pad hidden / out feature dims to multiples of this
SUBLANE = 8                 # pad batch to multiples of this (f32 sublane)
TILE_B_MAX = 1024           # max batch rows per grid step when tiled
SINGLE_TILE_MAX_ROWS = 64   # above this, split into >=2 tiles (v7x megacore)


def _round_up(n, m):
    return ((n + m - 1) // m) * m


def fcnet_kernel(x_ref, w1_ref, b1_ref, w2_ref, b2_ref, o_ref):
    """Fused forward on one batch tile: sigmoid(x @ W1 + b1) @ W2 + b2.

    Matmuls run with bf16 operands (native MXU rate on all generations) and f32
    accumulation; bias add + sigmoid stay in f32 (v5e's VPU/EUP have no bf16).
    Hidden/out dims are lane-padded; padded hidden lanes carry sigmoid(0)=0.5
    but hit the zero-padded rows of W2 and cancel exactly.
    """
    x = x_ref[...].astype(jnp.bfloat16)                                  # (TB, K)
    h = jnp.dot(x, w1_ref[...], preferred_element_type=jnp.float32)     # MXU bf16
    h = jax.nn.sigmoid(h + b1_ref[...])                                  # f32, EUP
    y = jnp.dot(h.astype(jnp.bfloat16), w2_ref[...],
                preferred_element_type=jnp.float32)                      # MXU bf16
    o_ref[...] = (y + b2_ref[...]).astype(o_ref.dtype)                   # lane-dense store


def fcnet_forward(x, w1p, b1p, w2p, b2p, out_dim):
    """x: (B, in_dim) f32, un-padded K. w*/b*: params from pad_params().

    Returns (B, out_dim), sliced back from the lane-dense padded kernel output.
    """
    B, in_dim = x.shape
    assert w1p.shape[0] == in_dim, "W1 keeps the true (un-padded) K"
    h_pad = w1p.shape[1]
    o_pad = w2p.shape[1]

    # Batch only needs to be a multiple of the sublane (8); K stays un-padded.
    bp = _round_up(B, SUBLANE)
    xp = x if bp == B else jnp.pad(x, ((0, bp - B), (0, 0)))

    out_shape = jax.ShapeDtypeStruct((bp, o_pad), x.dtype)

    if bp <= SINGLE_TILE_MAX_ROWS:
        # Tiny batch: whole problem is one VMEM-resident tile; explicit VMEM
        # whole-array specs keep placement deterministic across generations.
        vmem = pltpu.MemorySpace.VMEM
        out_p = pl.pallas_call(
            fcnet_kernel,
            out_shape=out_shape,
            in_specs=[pl.BlockSpec(memory_space=vmem)] * 5,
            out_specs=pl.BlockSpec(memory_space=vmem),
        )(xp, w1p, b1p, w2p, b2p)
    else:
        # Batch-tiled: at least 2 tiles so both v7x TensorCores get work, but
        # tiles capped at TILE_B_MAX rows; cdiv grid => ragged trailing block is
        # masked by Pallas instead of padding B up to a whole tile.
        tile_b = min(TILE_B_MAX, _round_up(pl.cdiv(bp, 2), SUBLANE))
        n_tiles = pl.cdiv(bp, tile_b)
        out_p = pl.pallas_call(
            fcnet_kernel,
            out_shape=out_shape,
            grid=(n_tiles,),
            in_specs=[
                pl.BlockSpec((tile_b, in_dim), lambda i: (i, 0)),   # x tile
                pl.BlockSpec((in_dim, h_pad), lambda i: (0, 0)),    # W1 resident
                pl.BlockSpec((1, h_pad), lambda i: (0, 0)),         # b1 resident
                pl.BlockSpec((h_pad, o_pad), lambda i: (0, 0)),     # W2 resident
                pl.BlockSpec((1, o_pad), lambda i: (0, 0)),         # b2 resident
            ],
            out_specs=pl.BlockSpec((tile_b, o_pad), lambda i: (i, 0)),
            compiler_params=pltpu.CompilerParams(
                dimension_semantics=("parallel",),
            ),
        )(xp, w1p, b1p, w2p, b2p)

    # NOTE: when composing inside a larger jit, prefer consuming the padded
    # lane-dense buffer directly (or fusing this slice) instead of paying for a
    # separate HBM->HBM slice op; it is kept here only to return FCNet's shape.
    return out_p[:B, :out_dim]


def init_linear_params(key, fan_in, fan_out, dtype=jnp.float32):
    """torch.nn.Linear default init: W, b ~ U(-1/sqrt(fan_in), 1/sqrt(fan_in)).
    Stored as [fan_in, fan_out]."""
    kw, kb = jax.random.split(key)
    bound = 1.0 / math.sqrt(fan_in)
    w = jax.random.uniform(kw, (fan_in, fan_out), dtype, minval=-bound, maxval=bound)
    b = jax.random.uniform(kb, (1, fan_out), dtype, minval=-bound, maxval=bound)
    return w, b


def pad_params(w1, b1, w2, b2, mxu_dtype=jnp.bfloat16):
    """Zero-pad hidden/out dims to 128-lane multiples (done once, offline).

    K (in_dim) is intentionally left un-padded: block last dims equal to the
    full array dim are legal and Mosaic pads the MXU operand internally.
    Weights are stored in bf16 (MXU-native); biases stay f32.

    GUARD: padded rows of W2 MUST remain zero. Padded hidden lanes evaluate to
    sigmoid(0)=0.5 and rely on those zero rows to cancel exactly; never re-init
    or update w2p in place without re-zeroing the pad rows.
    """
    in_dim, hidden = w1.shape
    out_dim = w2.shape[1]
    h_pad = _round_up(hidden, LANE)
    o_pad = _round_up(out_dim, LANE)

    w1p = jnp.pad(w1, ((0, 0), (0, h_pad - hidden))).astype(mxu_dtype)
    b1p = jnp.pad(b1, ((0, 0), (0, h_pad - hidden)))
    w2p = jnp.pad(w2, ((0, h_pad - hidden), (0, o_pad - out_dim))).astype(mxu_dtype)
    b2p = jnp.pad(b2, ((0, 0), (0, o_pad - out_dim)))
    return w1p, b1p, w2p, b2p


if __name__ == "__main__":
    # FCNet(in_dim=32, out_dim=16, l_hidden=(50,), activation='sigmoid',
    #       out_activation='linear')
    B, in_dim, hidden, out_dim = 8, 32, 50, 16

    key = jax.random.PRNGKey(0)
    kx, k1, k2, kx2 = jax.random.split(key, 4)

    x = jax.random.normal(kx, (B, in_dim), jnp.float32)
    w1, b1 = init_linear_params(k1, in_dim, hidden)
    w2, b2 = init_linear_params(k2, hidden, out_dim)
    w1p, b1p, w2p, b2p = pad_params(w1, b1, w2, b2)

    f32 = jnp.float32

    def ref_f32(xx):
        # Original FCNet semantics (full f32).
        return jax.nn.sigmoid(xx @ w1 + b1) @ w2 + b2

    def ref_bf16(xx):
        # Mirrors the kernel's bf16-operand / f32-accumulate matmuls exactly.
        xb = xx.astype(jnp.bfloat16).astype(f32)
        w1b = w1.astype(jnp.bfloat16).astype(f32)
        w2b = w2.astype(jnp.bfloat16).astype(f32)
        h = jax.nn.sigmoid(xb @ w1b + b1)
        return h.astype(jnp.bfloat16).astype(f32) @ w2b + b2

    # Small batch: single-tile, grid-free path.
    y = jax.block_until_ready(fcnet_forward(x, w1p, b1p, w2p, b2p, out_dim))
    assert y.shape == (B, out_dim)
    assert jnp.allclose(y, ref_bf16(x), atol=1e-4, rtol=1e-4)
    assert jnp.allclose(y, ref_f32(x), atol=5e-2, rtol=5e-2)

    # Larger batch: exercises the 2-tile "parallel" grid path with a ragged
    # trailing block (600 rows -> two 304-row tiles, last one partially masked).
    B2 = 600
    x2 = jax.random.normal(kx2, (B2, in_dim), jnp.float32)
    y2 = jax.block_until_ready(fcnet_forward(x2, w1p, b1p, w2p, b2p, out_dim))
    assert y2.shape == (B2, out_dim)
    assert jnp.allclose(y2, ref_bf16(x2), atol=1e-4, rtol=1e-4)
    assert jnp.allclose(y2, ref_f32(x2), atol=5e-2, rtol=5e-2)

    print("KERNEL_OK")
</pallas_src>

<mosaic_0001>
module attributes {stable_mosaic.version = 11 : i64} {
  func.func @fcnet_kernel(%arg0: memref<8x32xf32, #tpu.memory_space<vmem>>, %arg1: memref<32x128xbf16, #tpu.memory_space<vmem>>, %arg2: memref<1x128xf32, #tpu.memory_space<vmem>>, %arg3: memref<128x128xbf16, #tpu.memory_space<vmem>>, %arg4: memref<1x128xf32, #tpu.memory_space<vmem>>, %arg5: memref<8x128xf32, #tpu.memory_space<vmem>>) attributes {dimension_semantics = [], scalar_prefetch = 0 : i64, scratch_operands = 0 : i64, tpu.core_type = #tpu.core_type<tc>} {
    %c0 = arith.constant 0 : index
    %c0_0 = arith.constant 0 : index
    %0 = vector.load %arg0[%c0, %c0_0] : memref<8x32xf32, #tpu.memory_space<vmem>>, vector<8x32xf32>
    %1 = arith.truncf %0 : vector<8x32xf32> to vector<8x32xbf16>
    %c0_1 = arith.constant 0 : index
    %c0_2 = arith.constant 0 : index
    %2 = vector.load %arg1[%c0_1, %c0_2] : memref<32x128xbf16, #tpu.memory_space<vmem>>, vector<32x128xbf16>
    %cst = arith.constant dense<0.000000e+00> : vector<8x128xf32>
    %3 = tpu.matmul %1, %2, %cst {dimension_numbers = #tpu.dot_dimension_numbers<[1], [0], [0], [1], [0, 0, 1, 1], [], []>} : vector<8x32xbf16>, vector<32x128xbf16>, vector<8x128xf32> -> vector<8x128xf32>
    %c0_3 = arith.constant 0 : index
    %c0_4 = arith.constant 0 : index
    %4 = vector.load %arg2[%c0_3, %c0_4] : memref<1x128xf32, #tpu.memory_space<vmem>>, vector<1x128xf32>
    %5 = vector.broadcast %4 : vector<1x128xf32> to vector<8x128xf32>
    %6 = arith.addf %3, %5 : vector<8x128xf32>
    %7 = arith.negf %6 : vector<8x128xf32>
    %8 = math.exp %7 : vector<8x128xf32>
    %cst_5 = arith.constant 1.000000e+00 : f32
    %9 = vector.broadcast %cst_5 : f32 to vector<8x128xf32>
    %10 = arith.addf %9, %8 : vector<8x128xf32>
    %11 = arith.divf %9, %10 : vector<8x128xf32>
    %12 = arith.truncf %11 : vector<8x128xf32> to vector<8x128xbf16>
    %c0_6 = arith.constant 0 : index
    %c0_7 = arith.constant 0 : index
    %13 = vector.load %arg3[%c0_6, %c0_7] : memref<128x128xbf16, #tpu.memory_space<vmem>>, vector<128x128xbf16>
    %cst_8 = arith.constant dense<0.000000e+00> : vector<8x128xf32>
    %14 = tpu.matmul %12, %13, %cst_8 {dimension_numbers = #tpu.dot_dimension_numbers<[1], [0], [0], [1], [0, 0, 1, 1], [], []>} : vector<8x128xbf16>, vector<128x128xbf16>, vector<8x128xf32> -> vector<8x128xf32>
    %c0_9 = arith.constant 0 : index
    %c0_10 = arith.constant 0 : index
    %15 = vector.load %arg4[%c0_9, %c0_10] : memref<1x128xf32, #tpu.memory_space<vmem>>, vector<1x128xf32>
    %16 = vector.broadcast %15 : vector<1x128xf32> to vector<8x128xf32>
    %17 = arith.addf %14, %16 : vector<8x128xf32>
    %c0_11 = arith.constant 0 : index
    %c0_12 = arith.constant 0 : index
    %18 = vector.load %arg5[%c0_11, %c0_12] : memref<8x128xf32, #tpu.memory_space<vmem>>, vector<8x128xf32>
    tpu.vector_store %arg5[%c0_11, %c0_12], %17 {strides = array<i32>} : memref<8x128xf32, #tpu.memory_space<vmem>>, vector<8x128xf32>,
    return
  }
}

</mosaic_0001>

<llo_original>
// kernel: tpu_custom_call.1
$region0: #{tpu_custom_call.1}
  #allocation0 [shape = 'u32[]', space=smem, size = 0x4, offset = 0x4, fixed_abs, tag = 'smem constant byte address 0x4 - core index']
  #allocation1 [shape = 'u32[144,128]{1,0:T(1,128)}', space=vmem, size = 0x12000, scoped, tag = 'internal scratch']
  %s0 = inlined_call_operand.hbm [shape: f32[8,32], index: 0, kind: input, shape index: {}]
  %s1 = inlined_call_operand.hbm [shape: bf16[32,128], index: 1, kind: input, shape index: {}]
  %s2 = inlined_call_operand.vmem [shape: f32[1,128], index: 2, kind: input, shape index: {}]
  %s3 = inlined_call_operand.hbm [shape: bf16[128,128], index: 3, kind: input, shape index: {}]
  %s4 = inlined_call_operand.vmem [shape: f32[1,128], index: 4, kind: input, shape index: {}]
  %s5 = inlined_call_operand.hbm [shape: f32[8,128], index: 5, kind: output, shape index: {}]
  %s6 = sld [smem:[#allocation0]]
  $region42: #{tpu_custom_call.1} parent=0
    _
  %s8 = ssub.s32 1, %s6
  %s9 = scalar_select 0, %s8, %s6
  $region1: #{tpu_custom_call.1} parent=0
    #allocation2 [shape = 'u8[4096]{0}', space=vmem, size = 0x1000, scoped, tag = 'input window, operand 0, single buffered']
    #allocation3 [shape = 's32[1]{0}', space=sflag, size = 0x4, scoped, tag = 'scoped memory for tpu_custom_call.1']
    #allocation4 [shape = 's32[1]{0}', space=sflag, size = 0x4, scoped, tag = 'scoped memory for tpu_custom_call.1']
    #allocation5 [shape = 'u8[8192]{0}', space=vmem, size = 0x2000, scoped, tag = 'input window, operand 1, single buffered']
    #allocation6 [shape = 's32[1]{0}', space=sflag, size = 0x4, scoped, tag = 'scoped memory for tpu_custom_call.1']
    #allocation7 [shape = 'u8[32768]{0}', space=vmem, size = 0x8000, scoped, tag = 'input window, operand 3, single buffered']
    #allocation8 [shape = 'u8[4096]{0}', space=vmem, size = 0x1000, scoped, tag = 'output window, operand 0, single buffered']
    %10 = vsyncpa [#allocation3], 0
    %11 = vsyncpa [#allocation6], 0
    %12 = vsyncpa [#allocation4], 0
    // Predicated region
    $region2: #{tpu_custom_call.1} parent=1 // pred_check
      _
    $region3: #{tpu_custom_call.1} parent=1 // pred_check_branch
      %14 = sbr.rel (0) target = $region5
    $region4: #{tpu_custom_call.1} parent=1 // pred_region
      %s16 = ssub.s32 128, 128
      %17 = vsyncadd [#allocation3], %s16
      %s19 = sshll.u32 [#allocation2], 4
      %s20 = int_to_ptr.vmem [resolvable:$true] %s19
      %22 = dma.hbm_to_vmem [thread:$0]  %s0, 128, %s20, [#allocation3]
    $region5: #{tpu_custom_call.1} parent=1 // pred_fallthru
      _
    // Predicated region
    $region6: #{tpu_custom_call.1} parent=1 // pred_check
      _
    $region7: #{tpu_custom_call.1} parent=1 // pred_check_branch
      %24 = sbr.rel (0) target = $region9
    $region8: #{tpu_custom_call.1} parent=1 // pred_region
      %s26 = ssub.s32 256, 256
      %27 = vsyncadd [#allocation6], %s26
      %s28 = sshll.u32 [#allocation5], 4
      %s29 = int_to_ptr.vmem [resolvable:$true] %s28
      %34 = dma.hbm_to_vmem [thread:$0]  %s1, 256, %s29, [#allocation6], 64, 64, 4
    $region9: #{tpu_custom_call.1} parent=1 // pred_fallthru
      _
    // Predicated region
    $region10: #{tpu_custom_call.1} parent=1 // pred_check
      _
    $region11: #{tpu_custom_call.1} parent=1 // pred_check_branch
      %36 = sbr.rel (0) target = $region13
    $region12: #{tpu_custom_call.1} parent=1 // pred_region
      _
    $region13: #{tpu_custom_call.1} parent=1 // pred_fallthru
      _
    // Predicated region
    $region14: #{tpu_custom_call.1} parent=1 // pred_check
      _
    $region15: #{tpu_custom_call.1} parent=1 // pred_check_branch
      %38 = sbr.rel (0) target = $region17
    $region16: #{tpu_custom_call.1} parent=1 // pred_region
      %s40 = ssub.s32 1024, 1024
      %41 = vsyncadd [#allocation6], %s40
      %s42 = sshll.u32 [#allocation7], 4
      %s43 = int_to_ptr.vmem [resolvable:$true] %s42
      %48 = dma.hbm_to_vmem [thread:$0]  %s3, 1024, %s43, [#allocation6], 64, 64, 4
    $region17: #{tpu_custom_call.1} parent=1 // pred_fallthru
      _
    // Predicated region
    $region18: #{tpu_custom_call.1} parent=1 // pred_check
      _
    $region19: #{tpu_custom_call.1} parent=1 // pred_check_branch
      %50 = sbr.rel (0) target = $region21
    $region20: #{tpu_custom_call.1} parent=1 // pred_region
      _
    $region21: #{tpu_custom_call.1} parent=1 // pred_fallthru
      _
    // Predicated region
    $region22: #{tpu_custom_call.1} parent=1 // pred_check
      _
    $region23: #{tpu_custom_call.1} parent=1 // pred_check_branch
      %52 = sbr.rel (0) target = $region25
    $region24: #{tpu_custom_call.1} parent=1 // pred_region
      %53 = dma.done [#allocation3], 128
    $region25: #{tpu_custom_call.1} parent=1 // pred_fallthru
      _
    // Predicated region
    $region26: #{tpu_custom_call.1} parent=1 // pred_check
      _
    $region27: #{tpu_custom_call.1} parent=1 // pred_check_branch
      %55 = sbr.rel (0) target = $region29
    $region28: #{tpu_custom_call.1} parent=1 // pred_region
      %56 = dma.done [#allocation6], 256
    $region29: #{tpu_custom_call.1} parent=1 // pred_fallthru
      _
    // Predicated region
    $region30: #{tpu_custom_call.1} parent=1 // pred_check
      _
    $region31: #{tpu_custom_call.1} parent=1 // pred_check_branch
      %58 = sbr.rel (0) target = $region33
    $region32: #{tpu_custom_call.1} parent=1 // pred_region
      %59 = dma.done [#allocation6], 1024
    $region33: #{tpu_custom_call.1} parent=1 // pred_fallthru
      _
    %v61 = vld [vmem:[#allocation2] sm:$0xff]
    %v62 = vpack.c.bf16 %v61, %v61
    %v63 = vld [vmem:[#allocation5] sm:$0xf]
    %v64 = vld [vmem:[#allocation5 + $0x4] sm:$0xf]
    %v65 = vld [vmem:[#allocation5 + $0x8] sm:$0xf]
    %v66 = vld [vmem:[#allocation5 + $0xc] sm:$0xf]
    %v67 = vld [vmem:[%s2] sm:$0x1]
    %v69 = vlaneseq
    %v70 = vshrl.u32 %v69, 7
    %v71 = vsub.s32 0, %v70
    %v72 = vrot.slane %v67, %v71
    %v78 = vunpack.c.l.b16 %v63
    %v79 = vunpack.c.l.b16 %v64
    %v80 = vunpack.c.l.b16 %v65
    %v81 = vunpack.c.l.b16 %v66
    %v82 = vpack.c.b16 %v79, %v78
    %v83 = vpack.c.b16 %v81, %v80
    %vm86 = vcmask 261120
    %v88 = vsel %vm86, %v62, 0
    %90 = vmatprep.subr.bf16.mxu0 0
    %91 = vmatpush1.bf16.msra.mxu0 0
    %92 = vmatprep.subr.bf16.mxu0 0
    %93 = vmatpush1.bf16.msra.mxu0 0
    %94 = vmatprep.subr.bf16.mxu0 0
    %95 = vmatpush1.bf16.msra.mxu0 0
    %96 = vmatprep.subr.bf16.mxu0 0
    %97 = vmatpush1.bf16.msra.mxu0 0
    %98 = vmatprep.subr.bf16.mxu0 0
    %99 = vmatpush1.bf16.msra.mxu0 0
    %100 = vmatprep.subr.bf16.mxu0 0
    %101 = vmatpush1.bf16.msra.mxu0 0
    %102 = vmatprep.subr.bf16.mxu0 0
    %103 = vmatpush1.bf16.msra.mxu0 %v83
    %104 = vmatprep.subr.bf16.mxu0 0
    %105 = vmatpush1.bf16.msra.mxu0 %v82
    %106 = vmatprep.subr.bf16.mxu0 0
    %107 = vmatpush2.bf16.msra.mxu0 0
    %108 = vmatprep.subr.bf16.mxu0 0
    %109 = vmatpush2.bf16.msra.mxu0 0
    %110 = vmatprep.subr.bf16.mxu0 0
    %111 = vmatpush2.bf16.msra.mxu0 0
    %112 = vmatprep.subr.bf16.mxu0 0
    %113 = vmatpush2.bf16.msra.mxu0 0
    %114 = vmatprep.subr.bf16.mxu0 0
    %115 = vmatpush2.bf16.msra.mxu0 0
    %116 = vmatprep.subr.bf16.mxu0 0
    %117 = vmatpush2.bf16.msra.mxu0 0
    %118 = vmatprep.subr.bf16.mxu0 0
    %119 = vmatpush2.bf16.msra.mxu0 0
    %120 = vmatprep.subr.bf16.mxu0 0
    %121 = vmatpush2.bf16.msra.mxu0 0
    %122 = vmatprep.mubr.bf16.mxu0 0
    %123 = vmatmul.mubr.bf16.gmra.mxu0 %v88
    %v124 = vpop.f32.mrf.mxu0
    %v125 = vadd.f32 %v72, %v124
    %v126 = vpop.f32.mrf.mxu0
    %v127 = vpop.f32.mrf.mxu0
    %v128 = vpop.f32.mrf.mxu0
    %129 = vdwg.mxu0
    %v130 = vxor.u32 %v125, 2147483648
    %v131 = vmul.f32 %v130, 1.442695
    %v132 = vpow.pop %v131
    %v133 = vadd.f32 %v132, 1.0
    %v134 = vrcp.pop %v133
    %v135 = vmul.f32 1.0, %v134
    %v136 = vpack.c.bf16 %v135, %v135
    %v137 = vld [vmem:[#allocation7] sm:$0xf]
    %v138 = vld [vmem:[#allocation7 + $0x4] sm:$0xf]
    %v139 = vld [vmem:[#allocation7 + $0x8] sm:$0xf]
    %v140 = vld [vmem:[#allocation7 + $0xc] sm:$0xf]
    %v141 = vld [vmem:[#allocation7 + $0x10] sm:$0xf]
    %v142 = vld [vmem:[#allocation7 + $0x14] sm:$0xf]
    %v143 = vld [vmem:[#allocation7 + $0x18] sm:$0xf]
    %v144 = vld [vmem:[#allocation7 + $0x1c] sm:$0xf]
    %v145 = vld [vmem:[#allocation7 + $0x20] sm:$0xf]
    %v146 = vld [vmem:[#allocation7 + $0x24] sm:$0xf]
    %v147 = vld [vmem:[#allocation7 + $0x28] sm:$0xf]
    %v148 = vld [vmem:[#allocation7 + $0x2c] sm:$0xf]
    %v149 = vld [vmem:[#allocation7 + $0x30] sm:$0xf]
    %v150 = vld [vmem:[#allocation7 + $0x34] sm:$0xf]
    %v151 = vld [vmem:[#allocation7 + $0x38] sm:$0xf]
    %v152 = vld [vmem:[#allocation7 + $0x3c] sm:$0xf]
    %v153 = vld [vmem:[%s4] sm:$0x1]
    %v155 = vlaneseq
    %v156 = vshrl.u32 %v155, 7
    %v157 = vsub.s32 0, %v156
    %v158 = vrot.slane %v153, %v157
    %v176 = vunpack.c.l.b16 %v137
    %v177 = vunpack.c.l.b16 %v138
    %v178 = vunpack.c.l.b16 %v139
    %v179 = vunpack.c.l.b16 %v140
    %v180 = vunpack.c.l.b16 %v141
    %v181 = vunpack.c.l.b16 %v142
    %v182 = vunpack.c.l.b16 %v143
    %v183 = vunpack.c.l.b16 %v144
    %v184 = vunpack.c.l.b16 %v145
    %v185 = vunpack.c.l.b16 %v146
    %v186 = vunpack.c.l.b16 %v147
    %v187 = vunpack.c.l.b16 %v148
    %v188 = vunpack.c.l.b16 %v149
    %v189 = vunpack.c.l.b16 %v150
    %v190 = vunpack.c.l.b16 %v151
    %v191 = vunpack.c.l.b16 %v152
    %v192 = vpack.c.b16 %v177, %v176
    %v193 = vpack.c.b16 %v179, %v178
    %v194 = vpack.c.b16 %v181, %v180
    %v195 = vpack.c.b16 %v183, %v182
    %v196 = vpack.c.b16 %v185, %v184
    %v197 = vpack.c.b16 %v187, %v186
    %v198 = vpack.c.b16 %v189, %v188
    %v199 = vpack.c.b16 %v191, %v190
    %208 = vmatprep.subr.bf16.mxu0 0
    %209 = vmatpush1.bf16.msra.mxu0 %v199
    %210 = vmatprep.subr.bf16.mxu0 0
    %211 = vmatpush1.bf16.msra.mxu0 %v198
    %212 = vmatprep.subr.bf16.mxu0 0
    %213 = vmatpush1.bf16.msra.mxu0 %v197
    %214 = vmatprep.subr.bf16.mxu0 0
    %215 = vmatpush1.bf16.msra.mxu0 %v196
    %216 = vmatprep.subr.bf16.mxu0 0
    %217 = vmatpush1.bf16.msra.mxu0 %v195
    %218 = vmatprep.subr.bf16.mxu0 0
    %219 = vmatpush1.bf16.msra.mxu0 %v194
    %220 = vmatprep.subr.bf16.mxu0 0
    %221 = vmatpush1.bf16.msra.mxu0 %v193
    %222 = vmatprep.subr.bf16.mxu0 0
    %223 = vmatpush1.bf16.msra.mxu0 %v192
    %224 = vmatprep.subr.bf16.mxu0 0
    %225 = vmatpush2.bf16.msra.mxu0 0
    %226 = vmatprep.subr.bf16.mxu0 0
    %227 = vmatpush2.bf16.msra.mxu0 0
    %228 = vmatprep.subr.bf16.mxu0 0
    %229 = vmatpush2.bf16.msra.mxu0 0
    %230 = vmatprep.subr.bf16.mxu0 0
    %231 = vmatpush2.bf16.msra.mxu0 0
    %232 = vmatprep.subr.bf16.mxu0 0
    %233 = vmatpush2.bf16.msra.mxu0 0
    %234 = vmatprep.subr.bf16.mxu0 0
    %235 = vmatpush2.bf16.msra.mxu0 0
    %236 = vmatprep.subr.bf16.mxu0 0
    %237 = vmatpush2.bf16.msra.mxu0 0
    %238 = vmatprep.subr.bf16.mxu0 0
    %239 = vmatpush2.bf16.msra.mxu0 0
    %240 = vmatprep.mubr.bf16.mxu0 0
    %241 = vmatmul.mubr.bf16.gmra.mxu0 %v136
    %v242 = vpop.f32.mrf.mxu0
    %v243 = vadd.f32 %v158, %v242
    %v244 = vpop.f32.mrf.mxu0
    %v245 = vpop.f32.mrf.mxu0
    %v246 = vpop.f32.mrf.mxu0
    %247 = vdwg.mxu0
    %248 = vst [vmem:[#allocation8] sm:$0xff] %v243
    // Predicated region
    $region34: #{tpu_custom_call.1} parent=1 // pred_check
      _
    $region35: #{tpu_custom_call.1} parent=1 // pred_check_branch
      %250 = sbr.rel (0) target = $region37
    $region36: #{tpu_custom_call.1} parent=1 // pred_region
      %s252 = ssub.s32 128, 128
      %253 = vsyncadd [#allocation4], %s252
      %s255 = sshll.u32 [#allocation8], 4
      %s256 = int_to_ptr.vmem [resolvable:$true] %s255
      %258 = dma.vmem_to_hbm [thread:$0]  %s256, 128, %s5, [#allocation4]
    $region37: #{tpu_custom_call.1} parent=1 // pred_fallthru
      _
    // Predicated region
    $region38: #{tpu_custom_call.1} parent=1 // pred_check
      _
    $region39: #{tpu_custom_call.1} parent=1 // pred_check_branch
      %260 = sbr.rel (0) target = $region41
    $region40: #{tpu_custom_call.1} parent=1 // pred_region
      %261 = dma.done [#allocation4], 128
    $region41: #{tpu_custom_call.1} parent=1 // pred_fallthru
      _
    %262 = vsyncpa [#allocation3], 1
    %263 = vsyncpa [#allocation6], 1
    %264 = vsyncpa [#allocation4], 1

</llo_original>
